<compile_context>
chip_gen: v7x
topology: tpu7x:2x2x1
jax: 0.10.0
libtpu: 0.0.40
codegen_flags: <defaults>
</compile_context>

<pallas_src>
import functools

import jax
import jax.numpy as jnp
from jax.experimental import pallas as pl
from jax.experimental.pallas import tpu as pltpu

_NEG_BIG = -1e30  # bias for padded output logits -> exp() underflows to 0


def _round_up(a, b):
    return (a + b - 1) // b * b


# ----------------------------- Pallas kernel --------------------------------

def _mlp_fused_kernel(*refs, num_layers, bias_offsets, bias_widths,
                      compute_dtype):
    """Entire MLP in one kernel body.

    refs = (x, w0, ..., w_{L-1}, biases_packed, out)
      * hidden layers: Linear -> ReLU -> Dropout (eval-mode identity)
      * output layer (columns padded to a multiple of 128): Linear -> log_softmax
    Biases live in a single packed (1, total) f32 array; per-layer segments are
    sliced with static 128-aligned offsets.
    """
    x_ref = refs[0]
    w_refs = refs[1:1 + num_layers]
    b_ref = refs[1 + num_layers]
    o_ref = refs[2 + num_layers]

    h = x_ref[...]  # already in compute dtype (bf16 or f32), cast in wrapper
    for i in range(num_layers):
        z = jnp.dot(h, w_refs[i][...], preferred_element_type=jnp.float32)
        off, wdt = bias_offsets[i], bias_widths[i]
        z = z + b_ref[:, off:off + wdt]          # f32 bias add
        if i < num_layers - 1:
            h = jnp.maximum(z, 0.0)              # ReLU in f32
            if compute_dtype != jnp.float32:
                h = h.astype(compute_dtype)      # back to bf16 for next matmul
            # Dropout: identity in eval mode.
        else:
            # log_softmax over lanes, all in f32 (padded cols carry -1e30 bias).
            m = jnp.max(z, axis=1, keepdims=True)
            s = z - m
            lse = jnp.log(jnp.sum(jnp.exp(s), axis=1, keepdims=True))
            o_ref[...] = (s - lse).astype(o_ref.dtype)


# ----------------------------- wrapper ---------------------------------------

def _pack_biases(params, n_pad_out):
    """Pack all biases into one lane-dense (1, total) f32 array.

    Each segment starts at a 128-aligned offset; the output-layer segment is
    padded with -1e30 so padded logits vanish under log_softmax.
    Returns (packed, offsets, widths) with static Python offsets/widths.
    """
    num_layers = len(params)
    chunks, offsets, widths = [], [], []
    cur = 0
    for i, (_, b) in enumerate(params):
        b = b.astype(jnp.float32)
        if i == num_layers - 1 and n_pad_out != b.shape[0]:
            b = jnp.concatenate(
                [b, jnp.full((n_pad_out - b.shape[0],), _NEG_BIG, jnp.float32)])
        width = b.shape[0]
        seg = _round_up(width, 128)
        if seg != width:
            b = jnp.concatenate([b, jnp.zeros((seg - width,), jnp.float32)])
        offsets.append(cur)
        widths.append(width)
        chunks.append(b)
        cur += seg
    packed = jnp.concatenate(chunks).reshape(1, cur)
    return packed, tuple(offsets), tuple(widths)


def network_forward(params, x, *, use_bf16=True, block_m=512,
                    slice_output=True):
    """Fused forward pass.

    params = [(W[in, out], b[out]), ...] (hidden layers then output layer)
    x      = [M, in]
    use_bf16: bf16 MXU operands (recommended on v5e/v6e/v7x); accumulation,
              bias add, ReLU and softmax stay f32.
    """
    M, K = x.shape
    num_layers = len(params)

    # ---- output-layer lane padding (e.g. 102 -> 128 columns) ---------------
    w_out, _ = params[-1]
    n_out = w_out.shape[1]
    n_pad_out = _round_up(n_out, 128)
    if n_pad_out != n_out:
        w_out = jnp.pad(w_out, ((0, 0), (0, n_pad_out - n_out)))

    compute_dtype = jnp.bfloat16 if use_bf16 else jnp.float32

    # Weights pre-cast ONCE in the wrapper (halves weight DMA in bf16 mode and
    # removes per-grid-step converts inside the kernel body).
    weights = [w.astype(compute_dtype) for (w, _) in params[:-1]]
    weights.append(w_out.astype(compute_dtype))

    biases, bias_offsets, bias_widths = _pack_biases(params, n_pad_out)

    # ---- batch tiling --------------------------------------------------------
    # Small M: one block (rounded up to a multiple of 8 sublanes).
    # Large M: pad to a multiple of 128 and use the biggest block (<= block_m)
    # that divides it, so the pipeline / megacore sharding always stays intact
    # and VMEM per step is bounded (fixes the old bm = M fallback).
    if M <= block_m:
        m_pad = _round_up(max(M, 8), 8)
        bm = m_pad
    else:
        m_pad = _round_up(M, 128)
        bm = 128
        for cand in (512, 256):
            if cand <= block_m and m_pad % cand == 0:
                bm = cand
                break

    x_in = x.astype(compute_dtype)          # halves activation DMA in bf16 mode
    if m_pad != M:
        x_in = jnp.pad(x_in, ((0, m_pad - M), (0, 0)))

    grid = (m_pad // bm,)

    in_specs = [pl.BlockSpec((bm, K), lambda i: (i, 0))]
    # Weight/bias blocks are grid-invariant (constant index_map) -> fetched once.
    # If hidden sizes are scaled up, add pipeline_mode=pl.Buffered(1) here to
    # avoid double-buffering them (pure VMEM headroom on v7x's 64 MiB).
    in_specs += [pl.BlockSpec(w.shape, lambda i: (0, 0)) for w in weights]
    in_specs += [pl.BlockSpec(biases.shape, lambda i: (0, 0))]

    out = pl.pallas_call(
        functools.partial(_mlp_fused_kernel,
                          num_layers=num_layers,
                          bias_offsets=bias_offsets,
                          bias_widths=bias_widths,
                          compute_dtype=compute_dtype),
        out_shape=jax.ShapeDtypeStruct((m_pad, n_pad_out), jnp.float32),
        grid=grid,
        in_specs=in_specs,
        out_specs=pl.BlockSpec((bm, n_pad_out), lambda i: (i, 0)),
        compiler_params=pltpu.CompilerParams(
            dimension_semantics=("parallel",)),
    )(x_in, *weights, biases)

    if slice_output:
        return out[:M, :n_out]
    # Large-M callers can take the padded (m_pad, n_pad_out) slab and slice /
    # fuse downstream to avoid an extra HBM round trip.
    return out


# ----------------------------- model init ------------------------------------

def init_params(key, input_layer, hidden_layers, output_layer):
    """Deterministic init; weights stored already transposed to [in, out]."""
    sizes = [input_layer] + list(hidden_layers) + [output_layer]
    params = []
    for fan_in, fan_out in zip(sizes[:-1], sizes[1:]):
        kw, kb, key = jax.random.split(key, 3)
        bound = 1.0 / jnp.sqrt(fan_in)  # PyTorch nn.Linear default init range
        w = jax.random.uniform(kw, (fan_in, fan_out), jnp.float32, -bound, bound)
        b = jax.random.uniform(kb, (fan_out,), jnp.float32, -bound, bound)
        params.append((w, b))
    return params


# ----------------------------- reference -------------------------------------

def network_forward_ref(params, x):
    for (w, b) in params[:-1]:
        x = jnp.maximum(x @ w + b, 0.0)
    w, b = params[-1]
    return jax.nn.log_softmax(x @ w + b, axis=1)


# ----------------------------- main -------------------------------------------

if __name__ == "__main__":
    # Scaled-down dims consistent with the module (4 hidden layers, 102 classes).
    BATCH = 8
    INPUT_LAYER = 512
    HIDDEN_LAYERS = [256, 256, 128, 128]
    OUTPUT_LAYER = 102

    key = jax.random.PRNGKey(0)
    kx, kp, kx2 = jax.random.split(key, 3)
    x = jax.random.normal(kx, (BATCH, INPUT_LAYER), dtype=jnp.float32)
    params = init_params(kp, INPUT_LAYER, HIDDEN_LAYERS, OUTPUT_LAYER)
    ref = network_forward_ref(params, x)

    # f32 MXU path (exact check against the pure-JAX reference).
    out = jax.block_until_ready(network_forward(params, x, use_bf16=False))
    assert out.shape == (BATCH, OUTPUT_LAYER), out.shape
    assert jnp.all(jnp.isfinite(out))
    assert jnp.allclose(out, ref, atol=1e-3, rtol=1e-3), (
        float(jnp.max(jnp.abs(out - ref))))

    # bf16 MXU path (recommended on v5e/v6e/v7x): f32 accumulation/softmax.
    out_bf16 = jax.block_until_ready(network_forward(params, x, use_bf16=True))
    assert out_bf16.shape == (BATCH, OUTPUT_LAYER)
    assert jnp.all(jnp.isfinite(out_bf16))
    assert jnp.allclose(out_bf16, ref, atol=0.25), (
        float(jnp.max(jnp.abs(out_bf16 - ref))))

    # Tiled, padded-batch path: M not a multiple of the block, multi-step grid.
    M2 = 250
    x2 = jax.random.normal(kx2, (M2, INPUT_LAYER), dtype=jnp.float32)
    ref2 = network_forward_ref(params, x2)
    out2 = jax.block_until_ready(
        network_forward(params, x2, use_bf16=False, block_m=128))
    assert out2.shape == (M2, OUTPUT_LAYER), out2.shape
    assert jnp.all(jnp.isfinite(out2))
    assert jnp.allclose(out2, ref2, atol=1e-3, rtol=1e-3), (
        float(jnp.max(jnp.abs(out2 - ref2))))

    print("KERNEL_OK")
</pallas_src>

<mosaic_0001>
module attributes {stable_mosaic.version = 11 : i64} {
  func.func @_mlp_fused_kernel(%arg0: i32, %arg1: memref<8x512xf32, #tpu.memory_space<vmem>>, %arg2: memref<512x256xf32, #tpu.memory_space<vmem>>, %arg3: memref<256x256xf32, #tpu.memory_space<vmem>>, %arg4: memref<256x128xf32, #tpu.memory_space<vmem>>, %arg5: memref<128x128xf32, #tpu.memory_space<vmem>>, %arg6: memref<128x128xf32, #tpu.memory_space<vmem>>, %arg7: memref<1x896xf32, #tpu.memory_space<vmem>>, %arg8: memref<8x128xf32, #tpu.memory_space<vmem>>) attributes {dimension_semantics = [#tpu.dimension_semantics<parallel>], iteration_bounds = array<i64: 1>, scalar_prefetch = 0 : i64, scratch_operands = 0 : i64, tpu.core_type = #tpu.core_type<tc>, window_params = [{transform_indices = @transform_0, window_bounds = array<i64: 8, 512>}, {pipeline_mode = #tpu.pipeline_mode<synchronous>, transform_indices = @transform_1, window_bounds = array<i64: 512, 256>}, {pipeline_mode = #tpu.pipeline_mode<synchronous>, transform_indices = @transform_2, window_bounds = array<i64: 256, 256>}, {pipeline_mode = #tpu.pipeline_mode<synchronous>, transform_indices = @transform_3, window_bounds = array<i64: 256, 128>}, {pipeline_mode = #tpu.pipeline_mode<synchronous>, transform_indices = @transform_4, window_bounds = array<i64: 128, 128>}, {pipeline_mode = #tpu.pipeline_mode<synchronous>, transform_indices = @transform_5, window_bounds = array<i64: 128, 128>}, {pipeline_mode = #tpu.pipeline_mode<synchronous>, transform_indices = @transform_6, window_bounds = array<i64: 1, 896>}, {transform_indices = @transform_7, window_bounds = array<i64: 8, 128>}]} {
    %c0 = arith.constant 0 : index
    %c0_0 = arith.constant 0 : index
    %0 = vector.load %arg1[%c0, %c0_0] : memref<8x512xf32, #tpu.memory_space<vmem>>, vector<8x512xf32>
    %c0_1 = arith.constant 0 : index
    %c0_2 = arith.constant 0 : index
    %1 = vector.load %arg2[%c0_1, %c0_2] : memref<512x256xf32, #tpu.memory_space<vmem>>, vector<512x256xf32>
    %cst = arith.constant dense<0.000000e+00> : vector<8x256xf32>
    %2 = tpu.matmul %0, %1, %cst {dimension_numbers = #tpu.dot_dimension_numbers<[1], [0], [0], [1], [0, 0, 1, 1], [], []>} : vector<8x512xf32>, vector<512x256xf32>, vector<8x256xf32> -> vector<8x256xf32>
    %c0_3 = arith.constant 0 : index
    %c0_4 = arith.constant 0 : index
    %3 = vector.load %arg7[%c0_3, %c0_4] : memref<1x896xf32, #tpu.memory_space<vmem>>, vector<1x256xf32>
    %4 = vector.broadcast %3 : vector<1x256xf32> to vector<8x256xf32>
    %5 = arith.addf %2, %4 : vector<8x256xf32>
    %cst_5 = arith.constant 0.000000e+00 : f32
    %6 = vector.broadcast %cst_5 : f32 to vector<8x256xf32>
    %7 = arith.maximumf %5, %6 : vector<8x256xf32>
    %c0_6 = arith.constant 0 : index
    %c0_7 = arith.constant 0 : index
    %8 = vector.load %arg3[%c0_6, %c0_7] : memref<256x256xf32, #tpu.memory_space<vmem>>, vector<256x256xf32>
    %cst_8 = arith.constant dense<0.000000e+00> : vector<8x256xf32>
    %9 = tpu.matmul %7, %8, %cst_8 {dimension_numbers = #tpu.dot_dimension_numbers<[1], [0], [0], [1], [0, 0, 1, 1], [], []>} : vector<8x256xf32>, vector<256x256xf32>, vector<8x256xf32> -> vector<8x256xf32>
    %c0_9 = arith.constant 0 : index
    %c256 = arith.constant 256 : index
    %10 = vector.load %arg7[%c0_9, %c256] : memref<1x896xf32, #tpu.memory_space<vmem>>, vector<1x256xf32>
    %11 = vector.broadcast %10 : vector<1x256xf32> to vector<8x256xf32>
    %12 = arith.addf %9, %11 : vector<8x256xf32>
    %cst_10 = arith.constant 0.000000e+00 : f32
    %13 = vector.broadcast %cst_10 : f32 to vector<8x256xf32>
    %14 = arith.maximumf %12, %13 : vector<8x256xf32>
    %c0_11 = arith.constant 0 : index
    %c0_12 = arith.constant 0 : index
    %15 = vector.load %arg4[%c0_11, %c0_12] : memref<256x128xf32, #tpu.memory_space<vmem>>, vector<256x128xf32>
    %cst_13 = arith.constant dense<0.000000e+00> : vector<8x128xf32>
    %16 = tpu.matmul %14, %15, %cst_13 {dimension_numbers = #tpu.dot_dimension_numbers<[1], [0], [0], [1], [0, 0, 1, 1], [], []>} : vector<8x256xf32>, vector<256x128xf32>, vector<8x128xf32> -> vector<8x128xf32>
    %c0_14 = arith.constant 0 : index
    %c512 = arith.constant 512 : index
    %17 = vector.load %arg7[%c0_14, %c512] : memref<1x896xf32, #tpu.memory_space<vmem>>, vector<1x128xf32>
    %18 = vector.broadcast %17 : vector<1x128xf32> to vector<8x128xf32>
    %19 = arith.addf %16, %18 : vector<8x128xf32>
    %cst_15 = arith.constant 0.000000e+00 : f32
    %20 = vector.broadcast %cst_15 : f32 to vector<8x128xf32>
    %21 = arith.maximumf %19, %20 : vector<8x128xf32>
    %c0_16 = arith.constant 0 : index
    %c0_17 = arith.constant 0 : index
    %22 = vector.load %arg5[%c0_16, %c0_17] : memref<128x128xf32, #tpu.memory_space<vmem>>, vector<128x128xf32>
    %cst_18 = arith.constant dense<0.000000e+00> : vector<8x128xf32>
    %23 = tpu.matmul %21, %22, %cst_18 {dimension_numbers = #tpu.dot_dimension_numbers<[1], [0], [0], [1], [0, 0, 1, 1], [], []>} : vector<8x128xf32>, vector<128x128xf32>, vector<8x128xf32> -> vector<8x128xf32>
    %c0_19 = arith.constant 0 : index
    %c640 = arith.constant 640 : index
    %24 = vector.load %arg7[%c0_19, %c640] : memref<1x896xf32, #tpu.memory_space<vmem>>, vector<1x128xf32>
    %25 = vector.broadcast %24 : vector<1x128xf32> to vector<8x128xf32>
    %26 = arith.addf %23, %25 : vector<8x128xf32>
    %cst_20 = arith.constant 0.000000e+00 : f32
    %27 = vector.broadcast %cst_20 : f32 to vector<8x128xf32>
    %28 = arith.maximumf %26, %27 : vector<8x128xf32>
    %c0_21 = arith.constant 0 : index
    %c0_22 = arith.constant 0 : index
    %29 = vector.load %arg6[%c0_21, %c0_22] : memref<128x128xf32, #tpu.memory_space<vmem>>, vector<128x128xf32>
    %cst_23 = arith.constant dense<0.000000e+00> : vector<8x128xf32>
    %30 = tpu.matmul %28, %29, %cst_23 {dimension_numbers = #tpu.dot_dimension_numbers<[1], [0], [0], [1], [0, 0, 1, 1], [], []>} : vector<8x128xf32>, vector<128x128xf32>, vector<8x128xf32> -> vector<8x128xf32>
    %c0_24 = arith.constant 0 : index
    %c768 = arith.constant 768 : index
    %31 = vector.load %arg7[%c0_24, %c768] : memref<1x896xf32, #tpu.memory_space<vmem>>, vector<1x128xf32>
    %32 = vector.broadcast %31 : vector<1x128xf32> to vector<8x128xf32>
    %33 = arith.addf %30, %32 : vector<8x128xf32>
    %cst_25 = arith.constant dense<0xFF800000> : vector<8xf32>
    %34 = vector.multi_reduction <maximumf>, %33, %cst_25 [1] : vector<8x128xf32> to vector<8xf32>
    %35 = vector.shape_cast %34 : vector<8xf32> to vector<8x1xf32>
    %36 = vector.broadcast %35 : vector<8x1xf32> to vector<8x128xf32>
    %37 = arith.subf %33, %36 : vector<8x128xf32>
    %38 = math.exp %37 : vector<8x128xf32>
    %cst_26 = arith.constant dense<0.000000e+00> : vector<8xf32>
    %39 = vector.multi_reduction <add>, %38, %cst_26 [1] : vector<8x128xf32> to vector<8xf32>
    %40 = vector.shape_cast %39 : vector<8xf32> to vector<8x1xf32>
    %41 = math.log %40 : vector<8x1xf32>
    %42 = vector.broadcast %41 : vector<8x1xf32> to vector<8x128xf32>
    %43 = arith.subf %37, %42 : vector<8x128xf32>
    %c0_27 = arith.constant 0 : index
    %c0_28 = arith.constant 0 : index
    %44 = vector.load %arg8[%c0_27, %c0_28] : memref<8x128xf32, #tpu.memory_space<vmem>>, vector<8x128xf32>
    tpu.vector_store %arg8[%c0_27, %c0_28], %43 {strides = array<i32>} : memref<8x128xf32, #tpu.memory_space<vmem>>, vector<8x128xf32>,
    return
  }
  func.func @transform_0(%arg0: i32) -> (i32, i32) {
    %c0_i32 = arith.constant 0 : i32
    %c0_i32_0 = arith.constant 0 : i32
    return %arg0, %c0_i32 : i32, i32
  }
  func.func @transform_1(%arg0: i32) -> (i32, i32) {
    %c0_i32 = arith.constant 0 : i32
    %c0_i32_0 = arith.constant 0 : i32
    %c0_i32_1 = arith.constant 0 : i32
    return %c0_i32, %c0_i32_0 : i32, i32
  }
  func.func @transform_2(%arg0: i32) -> (i32, i32) {
    %c0_i32 = arith.constant 0 : i32
    %c0_i32_0 = arith.constant 0 : i32
    %c0_i32_1 = arith.constant 0 : i32
    return %c0_i32, %c0_i32_0 : i32, i32
  }
  func.func @transform_3(%arg0: i32) -> (i32, i32) {
    %c0_i32 = arith.constant 0 : i32
    %c0_i32_0 = arith.constant 0 : i32
    %c0_i32_1 = arith.constant 0 : i32
    return %c0_i32, %c0_i32_0 : i32, i32
  }
  func.func @transform_4(%arg0: i32) -> (i32, i32) {
    %c0_i32 = arith.constant 0 : i32
    %c0_i32_0 = arith.constant 0 : i32
    %c0_i32_1 = arith.constant 0 : i32
    return %c0_i32, %c0_i32_0 : i32, i32
  }
  func.func @transform_5(%arg0: i32) -> (i32, i32) {
    %c0_i32 = arith.constant 0 : i32
    %c0_i32_0 = arith.constant 0 : i32
    %c0_i32_1 = arith.constant 0 : i32
    return %c0_i32, %c0_i32_0 : i32, i32
  }
  func.func @transform_6(%arg0: i32) -> (i32, i32) {
    %c0_i32 = arith.constant 0 : i32
    %c0_i32_0 = arith.constant 0 : i32
    %c0_i32_1 = arith.constant 0 : i32
    return %c0_i32, %c0_i32_0 : i32, i32
  }
  func.func @transform_7(%arg0: i32) -> (i32, i32) {
    %c0_i32 = arith.constant 0 : i32
    %c0_i32_0 = arith.constant 0 : i32
    return %arg0, %c0_i32 : i32, i32
  }
}

</mosaic_0001>

<llo_original>
// kernel: tpu_custom_call.1
$region0: #{tpu_custom_call.1}
  #allocation0 [shape = 'u32[]', space=smem, size = 0x4, offset = 0x4, fixed_abs, tag = 'smem constant byte address 0x4 - core index']
  #allocation1 [shape = 'u32[144,128]{1,0:T(1,128)}', space=vmem, size = 0x12000, scoped, tag = 'internal scratch']
  %s0 = inlined_call_operand.hbm [shape: f32[8,512], index: 0, kind: input, shape index: {}]
  %s1 = inlined_call_operand.hbm [shape: f32[512,256], index: 1, kind: input, shape index: {}]
  %s2 = inlined_call_operand.hbm [shape: f32[256,256], index: 2, kind: input, shape index: {}]
  %s3 = inlined_call_operand.hbm [shape: f32[256,128], index: 3, kind: input, shape index: {}]
  %s4 = inlined_call_operand.hbm [shape: f32[128,128], index: 4, kind: input, shape index: {}]
  %s5 = inlined_call_operand.hbm [shape: f32[128,128], index: 5, kind: input, shape index: {}]
  %s6 = inlined_call_operand.vmem [shape: f32[1,896], index: 6, kind: input, shape index: {}]
  %s7 = inlined_call_operand.hbm [shape: f32[8,128], index: 7, kind: output, shape index: {}]
  %s8 = sld [smem:[#allocation0]]
  $region62: #{tpu_custom_call.1} parent=0
    _
  %s10 = ssub.s32 1, %s8
  %s11 = scalar_select 0, %s10, %s8
  $region1: #{tpu_custom_call.1} parent=0
    #allocation2 [shape = 'u8[16384]{0}', space=vmem, size = 0x4000, scoped, tag = 'input window, operand 0, single buffered']
    #allocation3 [shape = 's32[1]{0}', space=sflag, size = 0x4, scoped, tag = 'scoped memory for tpu_custom_call.1']
    #allocation4 [shape = 's32[1]{0}', space=sflag, size = 0x4, scoped, tag = 'scoped memory for tpu_custom_call.1']
    #allocation5 [shape = 'u8[524288]{0}', space=vmem, size = 0x80000, scoped, tag = 'input window, operand 1, single buffered']
    #allocation6 [shape = 's32[1]{0}', space=sflag, size = 0x4, scoped, tag = 'scoped memory for tpu_custom_call.1']
    #allocation7 [shape = 'u8[262144]{0}', space=vmem, size = 0x40000, scoped, tag = 'input window, operand 2, single buffered']
    #allocation8 [shape = 'u8[131072]{0}', space=vmem, size = 0x20000, scoped, tag = 'input window, operand 3, single buffered']
    #allocation9 [shape = 's32[1]{0}', space=sflag, size = 0x4, scoped, tag = 'scoped memory for tpu_custom_call.1']
    #allocation10 [shape = 'u8[65536]{0}', space=vmem, size = 0x10000, scoped, tag = 'input window, operand 4, single buffered']
    #allocation11 [shape = 'u8[65536]{0}', space=vmem, size = 0x10000, scoped, tag = 'input window, operand 5, single buffered']
    #allocation12 [shape = 's32[1]{0}', space=sflag, size = 0x4, scoped, tag = 'scoped memory for tpu_custom_call.1']
    #allocation13 [shape = 'u8[4096]{0}', space=vmem, size = 0x1000, scoped, tag = 'output window, operand 0, single buffered']
    %12 = vsyncpa [#allocation3], 0
    %13 = vsyncpa [#allocation6], 0
    %14 = vsyncpa [#allocation9], 0
    %15 = vsyncpa [#allocation12], 0
    %16 = vsyncpa [#allocation4], 0
    // Predicated region
    $region2: #{tpu_custom_call.1} parent=1 // pred_check
      _
    $region3: #{tpu_custom_call.1} parent=1 // pred_check_branch
      %18 = sbr.rel (0) target = $region5
    $region4: #{tpu_custom_call.1} parent=1 // pred_region
      %s20 = ssub.s32 512, 512
      %21 = vsyncadd [#allocation3], %s20
      %s23 = sshll.u32 [#allocation2], 4
      %s24 = int_to_ptr.vmem [resolvable:$true] %s23
      %26 = dma.hbm_to_vmem [thread:$0]  %s0, 512, %s24, [#allocation3]
    $region5: #{tpu_custom_call.1} parent=1 // pred_fallthru
      _
    // Predicated region
    $region6: #{tpu_custom_call.1} parent=1 // pred_check
      _
    $region7: #{tpu_custom_call.1} parent=1 // pred_check_branch
      %28 = sbr.rel (0) target = $region9
    $region8: #{tpu_custom_call.1} parent=1 // pred_region
      %s30 = ssub.s32 16384, 16384
      %31 = vsyncadd [#allocation6], %s30
      %s32 = sshll.u32 [#allocation5], 4
      %s33 = int_to_ptr.vmem [resolvable:$true] %s32
      %38 = dma.hbm_to_vmem [thread:$0]  %s1, 16384, %s33, [#allocation6], 256, 256, 16
    $region9: #{tpu_custom_call.1} parent=1 // pred_fallthru
      _
    // Predicated region
    $region10: #{tpu_custom_call.1} parent=1 // pred_check
      _
    $region11: #{tpu_custom_call.1} parent=1 // pred_check_branch
      %40 = sbr.rel (0) target = $region13
    $region12: #{tpu_custom_call.1} parent=1 // pred_region
      %s42 = ssub.s32 8192, 8192
      %43 = vsyncadd [#allocation6], %s42
      %s44 = sshll.u32 [#allocation7], 4
      %s45 = int_to_ptr.vmem [resolvable:$true] %s44
      %50 = dma.hbm_to_vmem [thread:$0]  %s2, 8192, %s45, [#allocation6], 256, 256, 16
    $region13: #{tpu_custom_call.1} parent=1 // pred_fallthru
      _
    // Predicated region
    $region14: #{tpu_custom_call.1} parent=1 // pred_check
      _
    $region15: #{tpu_custom_call.1} parent=1 // pred_check_branch
      %52 = sbr.rel (0) target = $region17
    $region16: #{tpu_custom_call.1} parent=1 // pred_region
      %s54 = ssub.s32 4096, 4096
      %55 = vsyncadd [#allocation9], %s54
      %s56 = sshll.u32 [#allocation8], 4
      %s57 = int_to_ptr.vmem [resolvable:$true] %s56
      %62 = dma.hbm_to_vmem [thread:$0]  %s3, 4096, %s57, [#allocation9], 128, 128, 8
    $region17: #{tpu_custom_call.1} parent=1 // pred_fallthru
      _
    // Predicated region
    $region18: #{tpu_custom_call.1} parent=1 // pred_check
      _
    $region19: #{tpu_custom_call.1} parent=1 // pred_check_branch
      %64 = sbr.rel (0) target = $region21
    $region20: #{tpu_custom_call.1} parent=1 // pred_region
      %s66 = ssub.s32 2048, 2048
      %67 = vsyncadd [#allocation9], %s66
      %s68 = sshll.u32 [#allocation10], 4
      %s69 = int_to_ptr.vmem [resolvable:$true] %s68
      %74 = dma.hbm_to_vmem [thread:$0]  %s4, 2048, %s69, [#allocation9], 128, 128, 8
    $region21: #{tpu_custom_call.1} parent=1 // pred_fallthru
      _
    // Predicated region
    $region22: #{tpu_custom_call.1} parent=1 // pred_check
      _
    $region23: #{tpu_custom_call.1} parent=1 // pred_check_branch
      %76 = sbr.rel (0) target = $region25
    $region24: #{tpu_custom_call.1} parent=1 // pred_region
      %s78 = ssub.s32 2048, 2048
      %79 = vsyncadd [#allocation12], %s78
      %s80 = sshll.u32 [#allocation11], 4
      %s81 = int_to_ptr.vmem [resolvable:$true] %s80
      %86 = dma.hbm_to_vmem [thread:$0]  %s5, 2048, %s81, [#allocation12], 128, 128, 8
    $region25: #{tpu_custom_call.1} parent=1 // pred_fallthru
      _
    // Predicated region
    $region26: #{tpu_custom_call.1} parent=1 // pred_check
      _
    $region27: #{tpu_custom_call.1} parent=1 // pred_check_branch
      %88 = sbr.rel (0) target = $region29
    $region28: #{tpu_custom_call.1} parent=1 // pred_region
      _
    $region29: #{tpu_custom_call.1} parent=1 // pred_fallthru
      _
    // Predicated region
    $region30: #{tpu_custom_call.1} parent=1 // pred_check
      _
    $region31: #{tpu_custom_call.1} parent=1 // pred_check_branch
      %90 = sbr.rel (0) target = $region33
    $region32: #{tpu_custom_call.1} parent=1 // pred_region
      %91 = dma.done [#allocation3], 512
    $region33: #{tpu_custom_call.1} parent=1 // pred_fallthru
      _
    // Predicated region
    $region34: #{tpu_custom_call.1} parent=1 // pred_check
      _
    $region35: #{tpu_custom_call.1} parent=1 // pred_check_branch
      %93 = sbr.rel (0) target = $region37
    $region36: #{tpu_custom_call.1} parent=1 // pred_region
      %94 = dma.done [#allocation6], 16384
    $region37: #{tpu_custom_call.1} parent=1 // pred_fallthru
      _
    // Predicated region
    $region38: #{tpu_custom_call.1} parent=1 // pred_check
      _
    $region39: #{tpu_custom_call.1} parent=1 // pred_check_branch
      %96 = sbr.rel (0) target = $region41
    $region40: #{tpu_custom_call.1} parent=1 // pred_region
      %97 = dma.done [#allocation6], 8192
    $region41: #{tpu_custom_call.1} parent=1 // pred_fallthru
      _
    // Predicated region
    $region42: #{tpu_custom_call.1} parent=1 // pred_check
      _
    $region43: #{tpu_custom_call.1} parent=1 // pred_check_branch
      %99 = sbr.rel (0) target = $region45
    $region44: #{tpu_custom_call.1} parent=1 // pred_region
      %100 = dma.done [#allocation9], 4096
    $region45: #{tpu_custom_call.1} parent=1 // pred_fallthru
      _
    // Predicated region
    $region46: #{tpu_custom_call.1} parent=1 // pred_check
      _
    $region47: #{tpu_custom_call.1} parent=1 // pred_check_branch
      %102 = sbr.rel (0) target = $region49
    $region48: #{tpu_custom_call.1} parent=1 // pred_region
      %103 = dma.done [#allocation9], 2048
    $region49: #{tpu_custom_call.1} parent=1 // pred_fallthru
      _
    // Predicated region
    $region50: #{tpu_custom_call.1} parent=1 // pred_check
      _
    $region51: #{tpu_custom_call.1} parent=1 // pred_check_branch
      %105 = sbr.rel (0) target = $region53
    $region52: #{tpu_custom_call.1} parent=1 // pred_region
      %106 = dma.done [#allocation12], 2048
    $region53: #{tpu_custom_call.1} parent=1 // pred_fallthru
      _
    %v107 = vld [vmem:[#allocation2] sm:$0xff]
    %v108 = vld [vmem:[#allocation2 + $0x8] sm:$0xff]
    %v109 = vld [vmem:[#allocation2 + $0x10] sm:$0xff]
    %v110 = vld [vmem:[#allocation2 + $0x18] sm:$0xff]
    %v111 = vld [vmem:[#allocation5] sm:$0xff]
    %v112 = vld [vmem:[#allocation5 + $0x8] sm:$0xff]
    %v113 = vld [vmem:[#allocation5 + $0x10] sm:$0xff]
    %v114 = vld [vmem:[#allocation5 + $0x18] sm:$0xff]
    %v115 = vld [vmem:[#allocation5 + $0x20] sm:$0xff]
    %v116 = vld [vmem:[#allocation5 + $0x28] sm:$0xff]
    %v117 = vld [vmem:[#allocation5 + $0x30] sm:$0xff]
    %v118 = vld [vmem:[#allocation5 + $0x38] sm:$0xff]
    %v119 = vld [vmem:[#allocation5 + $0x40] sm:$0xff]
    %v120 = vld [vmem:[#allocation5 + $0x48] sm:$0xff]
    %v121 = vld [vmem:[#allocation5 + $0x50] sm:$0xff]
    %v122 = vld [vmem:[#allocation5 + $0x58] sm:$0xff]
    %v123 = vld [vmem:[#allocation5 + $0x60] sm:$0xff]
    %v124 = vld [vmem:[#allocation5 + $0x68] sm:$0xff]
    %v125 = vld [vmem:[#allocation5 + $0x70] sm:$0xff]
    %v126 = vld [vmem:[#allocation5 + $0x78] sm:$0xff]
    %v127 = vld [vmem:[#allocation5 + $0x80] sm:$0xff]
    %v128 = vld [vmem:[#allocation5 + $0x88] sm:$0xff]
    %v129 = vld [vmem:[#allocation5 + $0x90] sm:$0xff]
    %v130 = vld [vmem:[#allocation5 + $0x98] sm:$0xff]
    %v131 = vld [vmem:[#allocation5 + $0xa0] sm:$0xff]
    %v132 = vld [vmem:[#allocation5 + $0xa8] sm:$0xff]
    %v133 = vld [vmem:[#allocation5 + $0xb0] sm:$0xff]
    %v134 = vld [vmem:[#allocation5 + $0xb8] sm:$0xff]
    %v135 = vld [vmem:[#allocation5 + $0xc0] sm:$0xff]
    %v136 = vld [vmem:[#allocation5 + $0xc8] sm:$0xff]
    %v137 = vld [vmem:[#allocation5 + $0xd0] sm:$0xff]
    %v138 = vld [vmem:[#allocation5 + $0xd8] sm:$0xff]
    %v139 = vld [vmem:[#allocation5 + $0xe0] sm:$0xff]
    %v140 = vld [vmem:[#allocation5 + $0xe8] sm:$0xff]
    %v141 = vld [vmem:[#allocation5 + $0xf0] sm:$0xff]
    %v142 = vld [vmem:[#allocation5 + $0xf8] sm:$0xff]
    %v143 = vld [vmem:[#allocation5 + $0x100] sm:$0xff]
    %v144 = vld [vmem:[#allocation5 + $0x108] sm:$0xff]
    %v145 = vld [vmem:[#allocation5 + $0x110] sm:$0xff]
    %v146 = vld [vmem:[#allocation5 + $0x118] sm:$0xff]
    %v147 = vld [vmem:[#allocation5 + $0x120] sm:$0xff]
    %v148 = vld [vmem:[#allocation5 + $0x128] sm:$0xff]
    %v149 = vld [vmem:[#allocation5 + $0x130] sm:$0xff]
    %v150 = vld [vmem:[#allocation5 + $0x138] sm:$0xff]
    %v151 = vld [vmem:[#allocation5 + $0x140] sm:$0xff]
    %v152 = vld [vmem:[#allocation5 + $0x148] sm:$0xff]
    %v153 = vld [vmem:[#allocation5 + $0x150] sm:$0xff]
    %v154 = vld [vmem:[#allocation5 + $0x158] sm:$0xff]
    %v155 = vld [vmem:[#allocation5 + $0x160] sm:$0xff]
    %v156 = vld [vmem:[#allocation5 + $0x168] sm:$0xff]
    %v157 = vld [vmem:[#allocation5 + $0x170] sm:$0xff]
    %v158 = vld [vmem:[#allocation5 + $0x178] sm:$0xff]
    %v159 = vld [vmem:[#allocation5 + $0x180] sm:$0xff]
    %v160 = vld [vmem:[#allocation5 + $0x188] sm:$0xff]
    %v161 = vld [vmem:[#allocation5 + $0x190] sm:$0xff]
    %v162 = vld [vmem:[#allocation5 + $0x198] sm:$0xff]
    %v163 = vld [vmem:[#allocation5 + $0x1a0] sm:$0xff]
    %v164 = vld [vmem:[#allocation5 + $0x1a8] sm:$0xff]
    %v165 = vld [vmem:[#allocation5 + $0x1b0] sm:$0xff]
    %v166 = vld [vmem:[#allocation5 + $0x1b8] sm:$0xff]
    %v167 = vld [vmem:[#allocation5 + $0x1c0] sm:$0xff]
    %v168 = vld [vmem:[#allocation5 + $0x1c8] sm:$0xff]
    %v169 = vld [vmem:[#allocation5 + $0x1d0] sm:$0xff]
    %v170 = vld [vmem:[#allocation5 + $0x1d8] sm:$0xff]
    %v171 = vld [vmem:[#allocation5 + $0x1e0] sm:$0xff]
    %v172 = vld [vmem:[#allocation5 + $0x1e8] sm:$0xff]
    %v173 = vld [vmem:[#allocation5 + $0x1f0] sm:$0xff]
    %v174 = vld [vmem:[#allocation5 + $0x1f8] sm:$0xff]
    %v175 = vld [vmem:[#allocation5 + $0x200] sm:$0xff]
    %v176 = vld [vmem:[#allocation5 + $0x208] sm:$0xff]
    %v177 = vld [vmem:[#allocation5 + $0x210] sm:$0xff]
    %v178 = vld [vmem:[#allocation5 + $0x218] sm:$0xff]
    %v179 = vld [vmem:[#allocation5 + $0x220] sm:$0xff]
    %v180 = vld [vmem:[#allocation5 + $0x228] sm:$0xff]
    %v181 = vld [vmem:[#allocation5 + $0x230] sm:$0xff]
    %v182 = vld [vmem:[#allocation5 + $0x238] sm:$0xff]
    %v183 = vld [vmem:[#allocation5 + $0x240] sm:$0xff]
    %v184 = vld [vmem:[#allocation5 + $0x248] sm:$0xff]
    %v185 = vld [vmem:[#allocation5 + $0x250] sm:$0xff]
    %v186 = vld [vmem:[#allocation5 + $0x258] sm:$0xff]
    %v187 = vld [vmem:[#allocation5 + $0x260] sm:$0xff]
    %v188 = vld [vmem:[#allocation5 + $0x268] sm:$0xff]
    %v189 = vld [vmem:[#allocation5 + $0x270] sm:$0xff]
    %v190 = vld [vmem:[#allocation5 + $0x278] sm:$0xff]
    %v191 = vld [vmem:[#allocation5 + $0x280] sm:$0xff]
    %v192 = vld [vmem:[#allocation5 + $0x288] sm:$0xff]
    %v193 = vld [vmem:[#allocation5 + $0x290] sm:$0xff]
    %v194 = vld [vmem:[#allocation5 + $0x298] sm:$0xff]
    %v195 = vld [vmem:[#allocation5 + $0x2a0] sm:$0xff]
    %v196 = vld [vmem:[#allocation5 + $0x2a8] sm:$0xff]
    %v197 = vld [vmem:[#allocation5 + $0x2b0] sm:$0xff]
    %v198 = vld [vmem:[#allocation5 + $0x2b8] sm:$0xff]
    %v199 = vld [vmem:[#allocation5 + $0x2c0] sm:$0xff]
    %v200 = vld [vmem:[#allocation5 + $0x2c8] sm:$0xff]
    %v201 = vld [vmem:[#allocation5 + $0x2d0] sm:$0xff]
    %v202 = vld [vmem:[#allocation5 + $0x2d8] sm:$0xff]
    %v203 = vld [vmem:[#allocation5 + $0x2e0] sm:$0xff]
    %v204 = vld [vmem:[#allocation5 + $0x2e8] sm:$0xff]
    %v205 = vld [vmem:[#allocation5 + $0x2f0] sm:$0xff]
    %v206 = vld [vmem:[#allocation5 + $0x2f8] sm:$0xff]
    %v207 = vld [vmem:[#allocation5 + $0x300] sm:$0xff]
    %v208 = vld [vmem:[#allocation5 + $0x308] sm:$0xff]
    %v209 = vld [vmem:[#allocation5 + $0x310] sm:$0xff]
    %v210 = vld [vmem:[#allocation5 + $0x318] sm:$0xff]
    %v211 = vld [vmem:[#allocation5 + $0x320] sm:$0xff]
    %v212 = vld [vmem:[#allocation5 + $0x328] sm:$0xff]
    %v213 = vld [vmem:[#allocation5 + $0x330] sm:$0xff]
    %v214 = vld [vmem:[#allocation5 + $0x338] sm:$0xff]
    %v215 = vld [vmem:[#allocation5 + $0x340] sm:$0xff]
    %v216 = vld [vmem:[#allocation5 + $0x348] sm:$0xff]
    %v217 = vld [vmem:[#allocation5 + $0x350] sm:$0xff]
    %v218 = vld [vmem:[#allocation5 + $0x358] sm:$0xff]
    %v219 = vld [vmem:[#allocation5 + $0x360] sm:$0xff]
    %v220 = vld [vmem:[#allocation5 + $0x368] sm:$0xff]
    %v221 = vld [vmem:[#allocation5 + $0x370] sm:$0xff]
    %v222 = vld [vmem:[#allocation5 + $0x378] sm:$0xff]
    %v223 = vld [vmem:[#allocation5 + $0x380] sm:$0xff]
    %v224 = vld [vmem:[#allocation5 + $0x388] sm:$0xff]
    %v225 = vld [vmem:[#allocation5 + $0x390] sm:$0xff]
    %v226 = vld [vmem:[#allocation5 + $0x398] sm:$0xff]
    %v227 = vld [vmem:[#allocation5 + $0x3a0] sm:$0xff]
    %v228 = vld [vmem:[#allocation5 + $0x3a8] sm:$0xff]
    %v229 = vld [vmem:[#allocation5 + $0x3b0] sm:$0xff]
    %v230 = vld [vmem:[#allocation5 + $0x3b8] sm:$0xff]
    %v231 = vld [vmem:[#allocation5 + $0x3c0] sm:$0xff]
    %v232 = vld [vmem:[#allocation5 + $0x3c8] sm:$0xff]
    %v233 = vld [vmem:[#allocation5 + $0x3d0] sm:$0xff]
    %v234 = vld [vmem:[#allocation5 + $0x3d8] sm:$0xff]
    %v235 = vld [vmem:[#allocation5 + $0x3e0] sm:$0xff]
    %v236 = vld [vmem:[#allocation5 + $0x3e8] sm:$0xff]
    %v237 = vld [vmem:[#allocation5 + $0x3f0] sm:$0xff]
    %v238 = vld [vmem:[#allocation5 + $0x3f8] sm:$0xff]
    %v239 = vld [vmem:[%s6] sm:$0x3]
    %v241 = vlaneseq
    %v242 = vshrl.u32 %v241, 7
    %v243 = vsub.s32 0, %v242
    %v244 = vrot.slane %v239, %v243
    %v245 = vlaneseq
    %v246 = vshrl.u32 %v245, 7
    %v247 = vsub.s32 1, %v246
    %v248 = vrot.slane %v239, %v247
    %251 = vmatprep.subr.mxu0 %v112
    %252 = vmatpush1.msra.mxu0 %v111
    %253 = vmatprep.subr.mxu0 %v114
    %254 = vmatpush1.msra.mxu0 %v113
    %255 = vmatprep.subr.mxu0 %v116
    %256 = vmatpush1.msra.mxu0 %v115
    %257 = vmatprep.subr.mxu0 %v118
    %258 = vmatpush1.msra.mxu0 %v117
    %259 = vmatprep.subr.mxu0 %v120
    %260 = vmatpush1.msra.mxu0 %v119
    %261 = vmatprep.subr.mxu0 %v122
    %262 = vmatpush1.msra.mxu0 %v121
    %263 = vmatprep.subr.mxu0 %v124
    %264 = vmatpush1.msra.mxu0 %v123
    %265 = vmatprep.subr.mxu0 %v126
    %266 = vmatpush1.msra.mxu0 %v125
    %267 = vmatprep.subr.mxu0 %v128
    %268 = vmatpush1.msra.mxu0 %v127
    %269 = vmatprep.subr.mxu0 %v130
    %270 = vmatpush1.msra.mxu0 %v129
    %271 = vmatprep.subr.mxu0 %v132
    %272 = vmatpush1.msra.mxu0 %v131
    %273 = vmatprep.subr.mxu0 %v134
    %274 = vmatpush1.msra.mxu0 %v133
    %275 = vmatprep.subr.mxu0 %v136
    %276 = vmatpush1.msra.mxu0 %v135
    %277 = vmatprep.subr.mxu0 %v138
    %278 = vmatpush1.msra.mxu0 %v137
    %279 = vmatprep.subr.mxu0 %v140
    %280 = vmatpush1.msra.mxu0 %v139
    %281 = vmatprep.subr.mxu0 %v142
    %282 = vmatpush1.msra.mxu0 %v141
    %283 = vmatprep.subr.mxu0 %v144
    %284 = vmatpush1.msra.mxu0 %v143
    %285 = vmatprep.subr.mxu0 %v146
    %286 = vmatpush1.msra.mxu0 %v145
    %287 = vmatprep.subr.mxu0 %v148
    %288 = vmatpush1.msra.mxu0 %v147
    %289 = vmatprep.subr.mxu0 %v150
    %290 = vmatpush1.msra.mxu0 %v149
    %291 = vmatprep.subr.mxu0 %v152
    %292 = vmatpush1.msra.mxu0 %v151
    %293 = vmatprep.subr.mxu0 %v154
    %294 = vmatpush1.msra.mxu0 %v153
    %295 = vmatprep.subr.mxu0 %v156
    %296 = vmatpush1.msra.mxu0 %v155
    %297 = vmatprep.subr.mxu0 %v158
    %298 = vmatpush1.msra.mxu0 %v157
    %299 = vmatprep.subr.mxu0 %v160
    %300 = vmatpush1.msra.mxu0 %v159
    %301 = vmatprep.subr.mxu0 %v162
    %302 = vmatpush1.msra.mxu0 %v161
    %303 = vmatprep.subr.mxu0 %v164
    %304 = vmatpush1.msra.mxu0 %v163
    %305 = vmatprep.subr.mxu0 %v166
    %306 = vmatpush1.msra.mxu0 %v165
    %307 = vmatprep.subr.mxu0 %v168
    %308 = vmatpush1.msra.mxu0 %v167
    %309 = vmatprep.subr.mxu0 %v170
    %310 = vmatpush1.msra.mxu0 %v169
    %311 = vmatprep.subr.mxu0 %v172
    %312 = vmatpush1.msra.mxu0 %v171
    %313 = vmatprep.subr.mxu0 %v174
    %314 = vmatpush1.msra.mxu0 %v173
    %315 = vmatprep.mubr.f32.mxu0 %v108
    %316 = vmatmul.mubr.f32.gmra.mrb[0].mxu0 %v107
    %v317 = vpop.f32.mrb[0].mxu0
    %v318 = vadd.f32 %v244, %v317
    %v319 = vpop.f32.mrb[0].mxu0
    %v320 = vadd.f32 %v248, %v319
    %321 = vdwg.mxu0
    %322 = vmatprep.subr.mxu0 %v176
    %323 = vmatpush1.msra.mxu0 %v175
    %324 = vmatprep.subr.mxu0 %v178
    %325 = vmatpush1.msra.mxu0 %v177
    %326 = vmatprep.subr.mxu0 %v180
    %327 = vmatpush1.msra.mxu0 %v179
    %328 = vmatprep.subr.mxu0 %v182
    %329 = vmatpush1.msra.mxu0 %v181
    %330 = vmatprep.subr.mxu0 %v184
    %331 = vmatpush1.msra.mxu0 %v183
    %332 = vmatprep.subr.mxu0 %v186
    %333 = vmatpush1.msra.mxu0 %v185
    %334 = vmatprep.subr.mxu0 %v188
    %335 = vmatpush1.msra.mxu0 %v187
    %336 = vmatprep.subr.mxu0 %v190
    %337 = vmatpush1.msra.mxu0 %v189
    %338 = vmatprep.subr.mxu0 %v192
    %339 = vmatpush1.msra.mxu0 %v191
    %340 = vmatprep.subr.mxu0 %v194
    %341 = vmatpush1.msra.mxu0 %v193
    %342 = vmatprep.subr.mxu0 %v196
    %343 = vmatpush1.msra.mxu0 %v195
    %344 = vmatprep.subr.mxu0 %v198
    %345 = vmatpush1.msra.mxu0 %v197
    %346 = vmatprep.subr.mxu0 %v200
    %347 = vmatpush1.msra.mxu0 %v199
    %348 = vmatprep.subr.mxu0 %v202
    %349 = vmatpush1.msra.mxu0 %v201
    %350 = vmatprep.subr.mxu0 %v204
    %351 = vmatpush1.msra.mxu0 %v203
    %352 = vmatprep.subr.mxu0 %v206
    %353 = vmatpush1.msra.mxu0 %v205
    %354 = vmatprep.subr.mxu0 %v208
    %355 = vmatpush1.msra.mxu0 %v207
    %356 = vmatprep.subr.mxu0 %v210
    %357 = vmatpush1.msra.mxu0 %v209
    %358 = vmatprep.subr.mxu0 %v212
    %359 = vmatpush1.msra.mxu0 %v211
    %360 = vmatprep.subr.mxu0 %v214
    %361 = vmatpush1.msra.mxu0 %v213
    %362 = vmatprep.subr.mxu0 %v216
    %363 = vmatpush1.msra.mxu0 %v215
    %364 = vmatprep.subr.mxu0 %v218
    %365 = vmatpush1.msra.mxu0 %v217
    %366 = vmatprep.subr.mxu0 %v220
    %367 = vmatpush1.msra.mxu0 %v219
    %368 = vmatprep.subr.mxu0 %v222
    %369 = vmatpush1.msra.mxu0 %v221
    %370 = vmatprep.subr.mxu0 %v224
    %371 = vmatpush1.msra.mxu0 %v223
    %372 = vmatprep.subr.mxu0 %v226
    %373 = vmatpush1.msra.mxu0 %v225
    %374 = vmatprep.subr.mxu0 %v228
    %375 = vmatpush1.msra.mxu0 %v227
    %376 = vmatprep.subr.mxu0 %v230
    %377 = vmatpush1.msra.mxu0 %v229
    %378 = vmatprep.subr.mxu0 %v232
    %379 = vmatpush1.msra.mxu0 %v231
    %380 = vmatprep.subr.mxu0 %v234
    %381 = vmatpush1.msra.mxu0 %v233
    %382 = vmatprep.subr.mxu0 %v236
    %383 = vmatpush1.msra.mxu0 %v235
    %384 = vmatprep.subr.mxu0 %v238
    %385 = vmatpush1.msra.mxu0 %v237
    %386 = vmatprep.mubr.f32.mxu0 %v110
    %387 = vmatmul.mubr.f32.gmra.mrb[0].mxu0 %v109
    %v388 = vpop.f32.mrb[0].mxu0
    %v389 = vadd.f32 %v318, %v388
    %v390 = vpop.f32.mrb[0].mxu0
    %v391 = vadd.f32 %v320, %v390
    %392 = vdwg.mxu0
    %v393 = vmax.f32 %v389, 0.0
    %v394 = vmax.f32 %v391, 0.0
    %v395 = vld [vmem:[#allocation7] sm:$0xff]
    %v396 = vld [vmem:[#allocation7 + $0x8] sm:$0xff]
    %v397 = vld [vmem:[#allocation7 + $0x10] sm:$0xff]
    %v398 = vld [vmem:[#allocation7 + $0x18] sm:$0xff]
    %v399 = vld [vmem:[#allocation7 + $0x20] sm:$0xff]
    %v400 = vld [vmem:[#allocation7 + $0x28] sm:$0xff]
    %v401 = vld [vmem:[#allocation7 + $0x30] sm:$0xff]
    %v402 = vld [vmem:[#allocation7 + $0x38] sm:$0xff]
    %v403 = vld [vmem:[#allocation7 + $0x40] sm:$0xff]
    %v404 = vld [vmem:[#allocation7 + $0x48] sm:$0xff]
    %v405 = vld [vmem:[#allocation7 + $0x50] sm:$0xff]
    %v406 = vld [vmem:[#allocation7 + $0x58] sm:$0xff]
    %v407 = vld [vmem:[#allocation7 + $0x60] sm:$0xff]
    %v408 = vld [vmem:[#allocation7 + $0x68] sm:$0xff]
    %v409 = vld [vmem:[#allocation7 + $0x70] sm:$0xff]
    %v410 = vld [vmem:[#allocation7 + $0x78] sm:$0xff]
    %v411 = vld [vmem:[#allocation7 + $0x80] sm:$0xff]
    %v412 = vld [vmem:[#allocation7 + $0x88] sm:$0xff]
    %v413 = vld [vmem:[#allocation7 + $0x90] sm:$0xff]
    %v414 = vld [vmem:[#allocation7 + $0x98] sm:$0xff]
    %v415 = vld [vmem:[#allocation7 + $0xa0] sm:$0xff]
    %v416 = vld [vmem:[#allocation7 + $0xa8] sm:$0xff]
    %v417 = vld [vmem:[#allocation7 + $0xb0] sm:$0xff]
    %v418 = vld [vmem:[#allocation7 + $0xb8] sm:$0xff]
    %v419 = vld [vmem:[#allocation7 + $0xc0] sm:$0xff]
    %v420 = vld [vmem:[#allocation7 + $0xc8] sm:$0xff]
    %v421 = vld [vmem:[#allocation7 + $0xd0] sm:$0xff]
    %v422 = vld [vmem:[#allocation7 + $0xd8] sm:$0xff]
    %v423 = vld [vmem:[#allocation7 + $0xe0] sm:$0xff]
    %v424 = vld [vmem:[#allocation7 + $0xe8] sm:$0xff]
    %v425 = vld [vmem:[#allocation7 + $0xf0] sm:$0xff]
    %v426 = vld [vmem:[#allocation7 + $0xf8] sm:$0xff]
    %v427 = vld [vmem:[#allocation7 + $0x100] sm:$0xff]
    %v428 = vld [vmem:[#allocation7 + $0x108] sm:$0xff]
    %v429 = vld [vmem:[#allocation7 + $0x110] sm:$0xff]
    %v430 = vld [vmem:[#allocation7 + $0x118] sm:$0xff]
    %v431 = vld [vmem:[#allocation7 + $0x120] sm:$0xff]
    %v432 = vld [vmem:[#allocation7 + $0x128] sm:$0xff]
    %v433 = vld [vmem:[#allocation7 + $0x130] sm:$0xff]
    %v434 = vld [vmem:[#allocation7 + $0x138] sm:$0xff]
    %v435 = vld [vmem:[#allocation7 + $0x140] sm:$0xff]
    %v436 = vld [vmem:[#allocation7 + $0x148] sm:$0xff]
    %v437 = vld [vmem:[#allocation7 + $0x150] sm:$0xff]
    %v438 = vld [vmem:[#allocation7 + $0x158] sm:$0xff]
    %v439 = vld [vmem:[#allocation7 + $0x160] sm:$0xff]
    %v440 = vld [vmem:[#allocation7 + $0x168] sm:$0xff]
    %v441 = vld [vmem:[#allocation7 + $0x170] sm:$0xff]
    %v442 = vld [vmem:[#allocation7 + $0x178] sm:$0xff]
    %v443 = vld [vmem:[#allocation7 + $0x180] sm:$0xff]
    %v444 = vld [vmem:[#allocation7 + $0x188] sm:$0xff]
    %v445 = vld [vmem:[#allocation7 + $0x190] sm:$0xff]
    %v446 = vld [vmem:[#allocation7 + $0x198] sm:$0xff]
    %v447 = vld [vmem:[#allocation7 + $0x1a0] sm:$0xff]
    %v448 = vld [vmem:[#allocation7 + $0x1a8] sm:$0xff]
    %v449 = vld [vmem:[#allocation7 + $0x1b0] sm:$0xff]
    %v450 = vld [vmem:[#allocation7 + $0x1b8] sm:$0xff]
    %v451 = vld [vmem:[#allocation7 + $0x1c0] sm:$0xff]
    %v452 = vld [vmem:[#allocation7 + $0x1c8] sm:$0xff]
    %v453 = vld [vmem:[#allocation7 + $0x1d0] sm:$0xff]
    %v454 = vld [vmem:[#allocation7 + $0x1d8] sm:$0xff]
    %v455 = vld [vmem:[#allocation7 + $0x1e0] sm:$0xff]
    %v456 = vld [vmem:[#allocation7 + $0x1e8] sm:$0xff]
    %v457 = vld [vmem:[#allocation7 + $0x1f0] sm:$0xff]
    %v458 = vld [vmem:[#allocation7 + $0x1f8] sm:$0xff]
    %v459 = vld [vmem:[%s6 + $0x2] sm:$0x3]
    %v461 = vlaneseq
    %v462 = vshrl.u32 %v461, 7
    %v463 = vsub.s32 0, %v462
    %v464 = vrot.slane %v459, %v463
    %v465 = vlaneseq
    %v466 = vshrl.u32 %v465, 7
    %v467 = vsub.s32 1, %v466
    %v468 = vrot.slane %v459, %v467
    %471 = vmatprep.subr.mxu0 %v396
    %472 = vmatpush1.msra.mxu0 %v395
    %473 = vmatprep.subr.mxu0 %v398
    %474 = vmatpush1.msra.mxu0 %v397
    %475 = vmatprep.subr.mxu0 %v400
    %476 = vmatpush1.msra.mxu0 %v399
    %477 = vmatprep.subr.mxu0 %v402
    %478 = vmatpush1.msra.mxu0 %v401
    %479 = vmatprep.subr.mxu0 %v404
    %480 = vmatpush1.msra.mxu0 %v403
    %481 = vmatprep.subr.mxu0 %v406
    %482 = vmatpush1.msra.mxu0 %v405
    %483 = vmatprep.subr.mxu0 %v408
    %484 = vmatpush1.msra.mxu0 %v407
    %485 = vmatprep.subr.mxu0 %v410
    %486 = vmatpush1.msra.mxu0 %v409
    %487 = vmatprep.subr.mxu0 %v412
    %488 = vmatpush1.msra.mxu0 %v411
    %489 = vmatprep.subr.mxu0 %v414
    %490 = vmatpush1.msra.mxu0 %v413
    %491 = vmatprep.subr.mxu0 %v416
    %492 = vmatpush1.msra.mxu0 %v415
    %493 = vmatprep.subr.mxu0 %v418
    %494 = vmatpush1.msra.mxu0 %v417
    %495 = vmatprep.subr.mxu0 %v420
    %496 = vmatpush1.msra.mxu0 %v419
    %497 = vmatprep.subr.mxu0 %v422
    %498 = vmatpush1.msra.mxu0 %v421
    %499 = vmatprep.subr.mxu0 %v424
    %500 = vmatpush1.msra.mxu0 %v423
    %501 = vmatprep.subr.mxu0 %v426
    %502 = vmatpush1.msra.mxu0 %v425
    %503 = vmatprep.subr.mxu0 %v428
    %504 = vmatpush1.msra.mxu0 %v427
    %505 = vmatprep.subr.mxu0 %v430
    %506 = vmatpush1.msra.mxu0 %v429
    %507 = vmatprep.subr.mxu0 %v432
    %508 = vmatpush1.msra.mxu0 %v431
    %509 = vmatprep.subr.mxu0 %v434
    %510 = vmatpush1.msra.mxu0 %v433
    %511 = vmatprep.subr.mxu0 %v436
    %512 = vmatpush1.msra.mxu0 %v435
    %513 = vmatprep.subr.mxu0 %v438
    %514 = vmatpush1.msra.mxu0 %v437
    %515 = vmatprep.subr.mxu0 %v440
    %516 = vmatpush1.msra.mxu0 %v439
    %517 = vmatprep.subr.mxu0 %v442
    %518 = vmatpush1.msra.mxu0 %v441
    %519 = vmatprep.subr.mxu0 %v444
    %520 = vmatpush1.msra.mxu0 %v443
    %521 = vmatprep.subr.mxu0 %v446
    %522 = vmatpush1.msra.mxu0 %v445
    %523 = vmatprep.subr.mxu0 %v448
    %524 = vmatpush1.msra.mxu0 %v447
    %525 = vmatprep.subr.mxu0 %v450
    %526 = vmatpush1.msra.mxu0 %v449
    %527 = vmatprep.subr.mxu0 %v452
    %528 = vmatpush1.msra.mxu0 %v451
    %529 = vmatprep.subr.mxu0 %v454
    %530 = vmatpush1.msra.mxu0 %v453
    %531 = vmatprep.subr.mxu0 %v456
    %532 = vmatpush1.msra.mxu0 %v455
    %533 = vmatprep.subr.mxu0 %v458
    %534 = vmatpush1.msra.mxu0 %v457
    %535 = vmatprep.mubr.f32.mxu0 %v394
    %536 = vmatmul.mubr.f32.gmra.mrb[0].mxu0 %v393
    %v537 = vpop.f32.mrb[0].mxu0
    %v538 = vadd.f32 %v464, %v537
    %v539 = vpop.f32.mrb[0].mxu0
    %v540 = vadd.f32 %v468, %v539
    %541 = vdwg.mxu0
    %v542 = vmax.f32 %v538, 0.0
    %v543 = vmax.f32 %v540, 0.0
    %v544 = vld [vmem:[#allocation8] sm:$0xff]
    %v545 = vld [vmem:[#allocation8 + $0x8] sm:$0xff]
    %v546 = vld [vmem:[#allocation8 + $0x10] sm:$0xff]
    %v547 = vld [vmem:[#allocation8 + $0x18] sm:$0xff]
    %v548 = vld [vmem:[#allocation8 + $0x20] sm:$0xff]
    %v549 = vld [vmem:[#allocation8 + $0x28] sm:$0xff]
    %v550 = vld [vmem:[#allocation8 + $0x30] sm:$0xff]
    %v551 = vld [vmem:[#allocation8 + $0x38] sm:$0xff]
    %v552 = vld [vmem:[#allocation8 + $0x40] sm:$0xff]
    %v553 = vld [vmem:[#allocation8 + $0x48] sm:$0xff]
    %v554 = vld [vmem:[#allocation8 + $0x50] sm:$0xff]
    %v555 = vld [vmem:[#allocation8 + $0x58] sm:$0xff]
    %v556 = vld [vmem:[#allocation8 + $0x60] sm:$0xff]
    %v557 = vld [vmem:[#allocation8 + $0x68] sm:$0xff]
    %v558 = vld [vmem:[#allocation8 + $0x70] sm:$0xff]
    %v559 = vld [vmem:[#allocation8 + $0x78] sm:$0xff]
    %v560 = vld [vmem:[#allocation8 + $0x80] sm:$0xff]
    %v561 = vld [vmem:[#allocation8 + $0x88] sm:$0xff]
    %v562 = vld [vmem:[#allocation8 + $0x90] sm:$0xff]
    %v563 = vld [vmem:[#allocation8 + $0x98] sm:$0xff]
    %v564 = vld [vmem:[#allocation8 + $0xa0] sm:$0xff]
    %v565 = vld [vmem:[#allocation8 + $0xa8] sm:$0xff]
    %v566 = vld [vmem:[#allocation8 + $0xb0] sm:$0xff]
    %v567 = vld [vmem:[#allocation8 + $0xb8] sm:$0xff]
    %v568 = vld [vmem:[#allocation8 + $0xc0] sm:$0xff]
    %v569 = vld [vmem:[#allocation8 + $0xc8] sm:$0xff]
    %v570 = vld [vmem:[#allocation8 + $0xd0] sm:$0xff]
    %v571 = vld [vmem:[#allocation8 + $0xd8] sm:$0xff]
    %v572 = vld [vmem:[#allocation8 + $0xe0] sm:$0xff]
    %v573 = vld [vmem:[#allocation8 + $0xe8] sm:$0xff]
    %v574 = vld [vmem:[#allocation8 + $0xf0] sm:$0xff]
    %v575 = vld [vmem:[#allocation8 + $0xf8] sm:$0xff]
    %v576 = vld [vmem:[%s6 + $0x4] sm:$0x1]
    %v578 = vlaneseq
    %v579 = vshrl.u32 %v578, 7
    %v580 = vsub.s32 0, %v579
    %v581 = vrot.slane %v576, %v580
    %583 = vmatprep.subr.mxu0 0.0
    %584 = vmatpush1.msra.mxu0 %v544
    %585 = vmatprep.subr.mxu0 0.0
    %586 = vmatpush1.msra.mxu0 %v545
    %587 = vmatprep.subr.mxu0 0.0
    %588 = vmatpush1.msra.mxu0 %v546
    %589 = vmatprep.subr.mxu0 0.0
    %590 = vmatpush1.msra.mxu0 %v547
    %591 = vmatprep.subr.mxu0 0.0
    %592 = vmatpush1.msra.mxu0 %v548
    %593 = vmatprep.subr.mxu0 0.0
    %594 = vmatpush1.msra.mxu0 %v549
    %595 = vmatprep.subr.mxu0 0.0
    %596 = vmatpush1.msra.mxu0 %v550
    %597 = vmatprep.subr.mxu0 0.0
    %598 = vmatpush1.msra.mxu0 %v551
    %599 = vmatprep.subr.mxu0 0.0
    %600 = vmatpush1.msra.mxu0 %v552
    %601 = vmatprep.subr.mxu0 0.0
    %602 = vmatpush1.msra.mxu0 %v553
    %603 = vmatprep.subr.mxu0 0.0
    %604 = vmatpush1.msra.mxu0 %v554
    %605 = vmatprep.subr.mxu0 0.0
    %606 = vmatpush1.msra.mxu0 %v555
    %607 = vmatprep.subr.mxu0 0.0
    %608 = vmatpush1.msra.mxu0 %v556
    %609 = vmatprep.subr.mxu0 0.0
    %610 = vmatpush1.msra.mxu0 %v557
    %611 = vmatprep.subr.mxu0 0.0
    %612 = vmatpush1.msra.mxu0 %v558
    %613 = vmatprep.subr.mxu0 0.0
    %614 = vmatpush1.msra.mxu0 %v559
    %615 = vmatprep.subr.mxu0 0.0
    %616 = vmatpush1.msra.mxu0 %v560
    %617 = vmatprep.subr.mxu0 0.0
    %618 = vmatpush1.msra.mxu0 %v561
    %619 = vmatprep.subr.mxu0 0.0
    %620 = vmatpush1.msra.mxu0 %v562
    %621 = vmatprep.subr.mxu0 0.0
    %622 = vmatpush1.msra.mxu0 %v563
    %623 = vmatprep.subr.mxu0 0.0
    %624 = vmatpush1.msra.mxu0 %v564
    %625 = vmatprep.subr.mxu0 0.0
    %626 = vmatpush1.msra.mxu0 %v565
    %627 = vmatprep.subr.mxu0 0.0
    %628 = vmatpush1.msra.mxu0 %v566
    %629 = vmatprep.subr.mxu0 0.0
    %630 = vmatpush1.msra.mxu0 %v567
    %631 = vmatprep.subr.mxu0 0.0
    %632 = vmatpush1.msra.mxu0 %v568
    %633 = vmatprep.subr.mxu0 0.0
    %634 = vmatpush1.msra.mxu0 %v569
    %635 = vmatprep.subr.mxu0 0.0
    %636 = vmatpush1.msra.mxu0 %v570
    %637 = vmatprep.subr.mxu0 0.0
    %638 = vmatpush1.msra.mxu0 %v571
    %639 = vmatprep.subr.mxu0 0.0
    %640 = vmatpush1.msra.mxu0 %v572
    %641 = vmatprep.subr.mxu0 0.0
    %642 = vmatpush1.msra.mxu0 %v573
    %643 = vmatprep.subr.mxu0 0.0
    %644 = vmatpush1.msra.mxu0 %v574
    %645 = vmatprep.subr.mxu0 0.0
    %646 = vmatpush1.msra.mxu0 %v575
    %647 = vmatprep.mubr.f32.mxu0 %v543
    %648 = vmatmul.mubr.f32.gmra.mrb[0].mxu0 %v542
    %v649 = vpop.f32.mrb[0].mxu0
    %v650 = vadd.f32 %v581, %v649
    %v651 = vpop.f32.mrb[0].mxu0
    %652 = vdwg.mxu0
    %v653 = vmax.f32 %v650, 0.0
    %v654 = vld [vmem:[#allocation10] sm:$0xff]
    %v655 = vld [vmem:[#allocation10 + $0x8] sm:$0xff]
    %v656 = vld [vmem:[#allocation10 + $0x10] sm:$0xff]
    %v657 = vld [vmem:[#allocation10 + $0x18] sm:$0xff]
    %v658 = vld [vmem:[#allocation10 + $0x20] sm:$0xff]
    %v659 = vld [vmem:[#allocation10 + $0x28] sm:$0xff]
    %v660 = vld [vmem:[#allocation10 + $0x30] sm:$0xff]
    %v661 = vld [vmem:[#allocation10 + $0x38] sm:$0xff]
    %v662 = vld [vmem:[#allocation10 + $0x40] sm:$0xff]
    %v663 = vld [vmem:[#allocation10 + $0x48] sm:$0xff]
    %v664 = vld [vmem:[#allocation10 + $0x50] sm:$0xff]
    %v665 = vld [vmem:[#allocation10 + $0x58] sm:$0xff]
    %v666 = vld [vmem:[#allocation10 + $0x60] sm:$0xff]
    %v667 = vld [vmem:[#allocation10 + $0x68] sm:$0xff]
    %v668 = vld [vmem:[#allocation10 + $0x70] sm:$0xff]
    %v669 = vld [vmem:[#allocation10 + $0x78] sm:$0xff]
    %v670 = vld [vmem:[%s6 + $0x5] sm:$0x1]
    %v672 = vlaneseq
    %v673 = vshrl.u32 %v672, 7
    %v674 = vsub.s32 0, %v673
    %v675 = vrot.slane %v670, %v674
    %677 = vmatprep.subr.mxu0 0.0
    %678 = vmatpush1.msra.mxu0 %v654
    %679 = vmatprep.subr.mxu0 0.0
    %680 = vmatpush1.msra.mxu0 %v655
    %681 = vmatprep.subr.mxu0 0.0
    %682 = vmatpush1.msra.mxu0 %v656
    %683 = vmatprep.subr.mxu0 0.0
    %684 = vmatpush1.msra.mxu0 %v657
    %685 = vmatprep.subr.mxu0 0.0
    %686 = vmatpush1.msra.mxu0 %v658
    %687 = vmatprep.subr.mxu0 0.0
    %688 = vmatpush1.msra.mxu0 %v659
    %689 = vmatprep.subr.mxu0 0.0
    %690 = vmatpush1.msra.mxu0 %v660
    %691 = vmatprep.subr.mxu0 0.0
    %692 = vmatpush1.msra.mxu0 %v661
    %693 = vmatprep.subr.mxu0 0.0
    %694 = vmatpush1.msra.mxu0 %v662
    %695 = vmatprep.subr.mxu0 0.0
    %696 = vmatpush1.msra.mxu0 %v663
    %697 = vmatprep.subr.mxu0 0.0
    %698 = vmatpush1.msra.mxu0 %v664
    %699 = vmatprep.subr.mxu0 0.0
    %700 = vmatpush1.msra.mxu0 %v665
    %701 = vmatprep.subr.mxu0 0.0
    %702 = vmatpush1.msra.mxu0 %v666
    %703 = vmatprep.subr.mxu0 0.0
    %704 = vmatpush1.msra.mxu0 %v667
    %705 = vmatprep.subr.mxu0 0.0
    %706 = vmatpush1.msra.mxu0 %v668
    %707 = vmatprep.subr.mxu0 0.0
    %708 = vmatpush1.msra.mxu0 %v669
    %709 = vmatprep.subr.mxu0 0.0
    %710 = vmatpush1.msra.mxu0 0.0
    %711 = vmatprep.subr.mxu0 0.0
    %712 = vmatpush1.msra.mxu0 0.0
    %713 = vmatprep.subr.mxu0 0.0
    %714 = vmatpush1.msra.mxu0 0.0
    %715 = vmatprep.subr.mxu0 0.0
    %716 = vmatpush1.msra.mxu0 0.0
    %717 = vmatprep.subr.mxu0 0.0
    %718 = vmatpush1.msra.mxu0 0.0
    %719 = vmatprep.subr.mxu0 0.0
    %720 = vmatpush1.msra.mxu0 0.0
    %721 = vmatprep.subr.mxu0 0.0
    %722 = vmatpush1.msra.mxu0 0.0
    %723 = vmatprep.subr.mxu0 0.0
    %724 = vmatpush1.msra.mxu0 0.0
    %725 = vmatprep.subr.mxu0 0.0
    %726 = vmatpush1.msra.mxu0 0.0
    %727 = vmatprep.subr.mxu0 0.0
    %728 = vmatpush1.msra.mxu0 0.0
    %729 = vmatprep.subr.mxu0 0.0
    %730 = vmatpush1.msra.mxu0 0.0
    %731 = vmatprep.subr.mxu0 0.0
    %732 = vmatpush1.msra.mxu0 0.0
    %733 = vmatprep.subr.mxu0 0.0
    %734 = vmatpush1.msra.mxu0 0.0
    %735 = vmatprep.subr.mxu0 0.0
    %736 = vmatpush1.msra.mxu0 0.0
    %737 = vmatprep.subr.mxu0 0.0
    %738 = vmatpush1.msra.mxu0 0.0
    %739 = vmatprep.subr.mxu0 0.0
    %740 = vmatpush1.msra.mxu0 0.0
    %741 = vmatprep.mubr.f32.mxu0 0.0
    %742 = vmatmul.mubr.f32.gmra.mrb[0].mxu0 %v653
    %v743 = vpop.f32.mrb[0].mxu0
    %v744 = vadd.f32 %v675, %v743
    %v745 = vpop.f32.mrb[0].mxu0
    %746 = vdwg.mxu0
    %v747 = vmax.f32 %v744, 0.0
    %v748 = vld [vmem:[#allocation11] sm:$0xff]
    %v749 = vld [vmem:[#allocation11 + $0x8] sm:$0xff]
    %v750 = vld [vmem:[#allocation11 + $0x10] sm:$0xff]
    %v751 = vld [vmem:[#allocation11 + $0x18] sm:$0xff]
    %v752 = vld [vmem:[#allocation11 + $0x20] sm:$0xff]
    %v753 = vld [vmem:[#allocation11 + $0x28] sm:$0xff]
    %v754 = vld [vmem:[#allocation11 + $0x30] sm:$0xff]
    %v755 = vld [vmem:[#allocation11 + $0x38] sm:$0xff]
    %v756 = vld [vmem:[#allocation11 + $0x40] sm:$0xff]
    %v757 = vld [vmem:[#allocation11 + $0x48] sm:$0xff]
    %v758 = vld [vmem:[#allocation11 + $0x50] sm:$0xff]
    %v759 = vld [vmem:[#allocation11 + $0x58] sm:$0xff]
    %v760 = vld [vmem:[#allocation11 + $0x60] sm:$0xff]
    %v761 = vld [vmem:[#allocation11 + $0x68] sm:$0xff]
    %v762 = vld [vmem:[#allocation11 + $0x70] sm:$0xff]
    %v763 = vld [vmem:[#allocation11 + $0x78] sm:$0xff]
    %v764 = vld [vmem:[%s6 + $0x6] sm:$0x1]
    %v766 = vlaneseq
    %v767 = vshrl.u32 %v766, 7
    %v768 = vsub.s32 0, %v767
    %v769 = vrot.slane %v764, %v768
    %771 = vmatprep.subr.mxu0 0.0
    %772 = vmatpush1.msra.mxu0 %v748
    %773 = vmatprep.subr.mxu0 0.0
    %774 = vmatpush1.msra.mxu0 %v749
    %775 = vmatprep.subr.mxu0 0.0
    %776 = vmatpush1.msra.mxu0 %v750
    %777 = vmatprep.subr.mxu0 0.0
    %778 = vmatpush1.msra.mxu0 %v751
    %779 = vmatprep.subr.mxu0 0.0
    %780 = vmatpush1.msra.mxu0 %v752
    %781 = vmatprep.subr.mxu0 0.0
    %782 = vmatpush1.msra.mxu0 %v753
    %783 = vmatprep.subr.mxu0 0.0
    %784 = vmatpush1.msra.mxu0 %v754
    %785 = vmatprep.subr.mxu0 0.0
    %786 = vmatpush1.msra.mxu0 %v755
    %787 = vmatprep.subr.mxu0 0.0
    %788 = vmatpush1.msra.mxu0 %v756
    %789 = vmatprep.subr.mxu0 0.0
    %790 = vmatpush1.msra.mxu0 %v757
    %791 = vmatprep.subr.mxu0 0.0
    %792 = vmatpush1.msra.mxu0 %v758
    %793 = vmatprep.subr.mxu0 0.0
    %794 = vmatpush1.msra.mxu0 %v759
    %795 = vmatprep.subr.mxu0 0.0
    %796 = vmatpush1.msra.mxu0 %v760
    %797 = vmatprep.subr.mxu0 0.0
    %798 = vmatpush1.msra.mxu0 %v761
    %799 = vmatprep.subr.mxu0 0.0
    %800 = vmatpush1.msra.mxu0 %v762
    %801 = vmatprep.subr.mxu0 0.0
    %802 = vmatpush1.msra.mxu0 %v763
    %803 = vmatprep.subr.mxu0 0.0
    %804 = vmatpush1.msra.mxu0 0.0
    %805 = vmatprep.subr.mxu0 0.0
    %806 = vmatpush1.msra.mxu0 0.0
    %807 = vmatprep.subr.mxu0 0.0
    %808 = vmatpush1.msra.mxu0 0.0
    %809 = vmatprep.subr.mxu0 0.0
    %810 = vmatpush1.msra.mxu0 0.0
    %811 = vmatprep.subr.mxu0 0.0
    %812 = vmatpush1.msra.mxu0 0.0
    %813 = vmatprep.subr.mxu0 0.0
    %814 = vmatpush1.msra.mxu0 0.0
    %815 = vmatprep.subr.mxu0 0.0
    %816 = vmatpush1.msra.mxu0 0.0
    %817 = vmatprep.subr.mxu0 0.0
    %818 = vmatpush1.msra.mxu0 0.0
    %819 = vmatprep.subr.mxu0 0.0
    %820 = vmatpush1.msra.mxu0 0.0
    %821 = vmatprep.subr.mxu0 0.0
    %822 = vmatpush1.msra.mxu0 0.0
    %823 = vmatprep.subr.mxu0 0.0
    %824 = vmatpush1.msra.mxu0 0.0
    %825 = vmatprep.subr.mxu0 0.0
    %826 = vmatpush1.msra.mxu0 0.0
    %827 = vmatprep.subr.mxu0 0.0
    %828 = vmatpush1.msra.mxu0 0.0
    %829 = vmatprep.subr.mxu0 0.0
    %830 = vmatpush1.msra.mxu0 0.0
    %831 = vmatprep.subr.mxu0 0.0
    %832 = vmatpush1.msra.mxu0 0.0
    %833 = vmatprep.subr.mxu0 0.0
    %834 = vmatpush1.msra.mxu0 0.0
    %835 = vmatprep.mubr.f32.mxu0 0.0
    %836 = vmatmul.mubr.f32.gmra.mrb[0].mxu0 %v747
    %v837 = vpop.f32.mrb[0].mxu0
    %v838 = vadd.f32 %v769, %v837
    %v839 = vpop.f32.mrb[0].mxu0
    %840 = vdwg.mxu0
    %841 = vmax.xlane.f32.xlu0 %v838
    %v842 = vpop.xlane.xlu0 %841
    %v843 = vsub.f32 %v838, %v842
    %v844 = vmul.f32 %v843, 1.442695
    %v845 = vpow.pop %v844
    %846 = vadd.xlane.f32.xlu0 %v845
    %v847 = vpop.xlane.xlu0 %846
    %v848 = vlog2.pop %v847
    %v849 = vmul.f32 %v848, 0.6931472
    %v850 = vsub.f32 %v843, %v849
    %851 = vst [vmem:[#allocation13] sm:$0xff] %v850
    // Predicated region
    $region54: #{tpu_custom_call.1} parent=1 // pred_check
      _
    $region55: #{tpu_custom_call.1} parent=1 // pred_check_branch
      %853 = sbr.rel (0) target = $region57
    $region56: #{tpu_custom_call.1} parent=1 // pred_region
      %s855 = ssub.s32 128, 128
      %856 = vsyncadd [#allocation4], %s855
      %s858 = sshll.u32 [#allocation13], 4
      %s859 = int_to_ptr.vmem [resolvable:$true] %s858
      %861 = dma.vmem_to_hbm [thread:$0]  %s859, 128, %s7, [#allocation4]
    $region57: #{tpu_custom_call.1} parent=1 // pred_fallthru
      _
    // Predicated region
    $region58: #{tpu_custom_call.1} parent=1 // pred_check
      _
    $region59: #{tpu_custom_call.1} parent=1 // pred_check_branch
      %863 = sbr.rel (0) target = $region61
    $region60: #{tpu_custom_call.1} parent=1 // pred_region
      %864 = dma.done [#allocation4], 128
    $region61: #{tpu_custom_call.1} parent=1 // pred_fallthru
      _
    %865 = vsyncpa [#allocation3], 1
    %866 = vsyncpa [#allocation6], 1
    %867 = vsyncpa [#allocation9], 1
    %868 = vsyncpa [#allocation12], 1
    %869 = vsyncpa [#allocation4], 1

</llo_original>
